<compile_context>
chip_gen: v6e
topology: v6e:2x2x1
jax: 0.10.0
libtpu: 0.0.40
codegen_flags: <defaults>
</compile_context>

<pallas_src>
import jax
import jax.numpy as jnp
from jax import lax
from jax.experimental import pallas as pl
from jax.experimental.pallas import tpu as pltpu


def _round_up(x, m):
    return (x + m - 1) // m * m


def _deconv_kernel(x_ref, w_ref, b_ref, o_ref):
    # (Cr, Cin) @ (Cin, tm) on the MXU with f32 accumulation, fused bias add.
    # Pixels are on the lane axis -> lane-dense loads/stores for any Cin/Cout.
    o_ref[0] = (
        jnp.dot(w_ref[...], x_ref[0], preferred_element_type=jnp.float32)
        + b_ref[...]
    )


def deconv_block_forward(x_nchw, weight, bias, *, tm=1024,
                         stream_dtype=jnp.bfloat16):
    """ConvTranspose2d(kernel_size=2, stride=2, padding=0) forward.

    x_nchw: (N, Cin, H, W)
    weight: (Cin, Cout, 2, 2)   (PyTorch ConvTranspose2d layout)
    bias:   (Cout,)
    returns (N, Cout, 2H, 2W) float32

    Inputs/weights are streamed in `stream_dtype` (default bf16); accumulation
    and bias add are f32 (precision contract: bf16-rounded operands, f32 acc).
    """
    N, Cin, H, W = x_nchw.shape
    Cin_w, Cout, KH, KW = weight.shape
    assert Cin_w == Cin and (KH, KW) == (2, 2)

    Mpix = H * W
    C_full = KH * KW * Cout
    Cr = _round_up(C_full, 8)          # sublane-align the (dh, dw, co) axis
    itemsize = jnp.dtype(stream_dtype).itemsize

    # ---- tile-size selection ------------------------------------------------
    def ws_bytes(t):
        # worst case: everything double-buffered
        return (2 * Cin * t * itemsize        # streamed X tile
                + 2 * Cr * t * 4              # f32 output tile
                + 2 * Cr * Cin * itemsize     # resident weights
                + 2 * Cr * 4)                 # resident bias

    def shrink(t):
        return max(128, (t // 2) // 128 * 128)

    tm = max(128, min(_round_up(tm, 128), _round_up(Mpix, 128)))
    while tm > 128 and ws_bytes(tm) > 36 * 1024 * 1024:
        tm = shrink(tm)
    # enough grid steps for v7x's two TensorCores (no effect on v5e/v6e)
    while tm > 128 and N * pl.cdiv(Mpix, tm) < 4:
        tm = shrink(tm)

    Mpix_pad = _round_up(Mpix, tm)

    # ---- glue: X stays channel-major, pixels flattened (free reshape) -------
    x3 = x_nchw.reshape(N, Cin, Mpix).astype(stream_dtype)
    if Mpix_pad != Mpix:
        x3 = jnp.pad(x3, ((0, 0), (0, 0), (0, Mpix_pad - Mpix)))

    # weight rows indexed (dh, dw, co); bias derived with the SAME row order
    w_mat = jnp.transpose(weight, (2, 3, 1, 0)).reshape(C_full, Cin)
    b_col = jnp.broadcast_to(bias.astype(jnp.float32)[None, None, :],
                             (KH, KW, Cout)).reshape(C_full, 1)
    if Cr != C_full:
        w_mat = jnp.pad(w_mat, ((0, Cr - C_full), (0, 0)))
        b_col = jnp.pad(b_col, ((0, Cr - C_full), (0, 0)))
    w_mat = w_mat.astype(stream_dtype)

    grid = (N, Mpix_pad // tm)
    y = pl.pallas_call(
        _deconv_kernel,
        out_shape=jax.ShapeDtypeStruct((N, Cr, Mpix_pad), jnp.float32),
        grid_spec=pltpu.PrefetchScalarGridSpec(
            num_scalar_prefetch=0,
            grid=grid,
            in_specs=[
                pl.BlockSpec((1, Cin, tm), lambda n, i: (n, 0, i)),  # streamed X
                pl.BlockSpec((Cr, Cin), lambda n, i: (0, 0)),        # resident W
                pl.BlockSpec((Cr, 1), lambda n, i: (0, 0)),          # resident b
            ],
            out_specs=pl.BlockSpec((1, Cr, tm), lambda n, i: (n, 0, i)),
        ),
        compiler_params=pltpu.CompilerParams(
            # independent output tiles -> fully parallel grid (both v7x TCs)
            dimension_semantics=("parallel", "parallel"),
            # working set is kept <= 36 MiB above; stay inside v7x's 64 MiB
            vmem_limit_bytes=48 * 1024 * 1024,
        ),
    )(x3, w_mat, b_col)

    # ---- single fused layout pass: scatter 2x2 patches into the output ------
    y = y[:, :C_full, :Mpix]
    y = y.reshape(N, KH, KW, Cout, H, W)
    y = jnp.transpose(y, (0, 3, 4, 1, 5, 2)).reshape(N, Cout, H * KH, W * KW)
    return y


def _reference(x, weight, bias):
    """Pure-JAX reference for ConvTranspose2d(k=2, s=2, p=0)."""
    N, Cin, H, W = x.shape
    _, Cout, KH, KW = weight.shape
    y = jnp.einsum('nihw,iodk->nohdwk', x, weight,
                   precision=lax.Precision.HIGHEST)
    y = y.reshape(N, Cout, H * KH, W * KW)
    return y + bias.reshape(1, -1, 1, 1)


if __name__ == "__main__":
    key = jax.random.PRNGKey(0)
    k_x, k_w, k_b = jax.random.split(key, 3)

    N, Cin, H, W = 2, 4, 16, 16
    Cout, KS = 16, 2

    x = jax.random.normal(k_x, (N, Cin, H, W), dtype=jnp.float32)
    weight = jax.random.normal(k_w, (Cin, Cout, KS, KS), dtype=jnp.float32) * 0.1
    bias = jax.random.normal(k_b, (Cout,), dtype=jnp.float32) * 0.1

    out = deconv_block_forward(x, weight, bias)
    out = jax.block_until_ready(out)
    assert out.shape == (N, Cout, 2 * H, 2 * W)

    # tight check vs a reference fed the same bf16-rounded operands
    ref_bf16 = _reference(x.astype(jnp.bfloat16).astype(jnp.float32),
                          weight.astype(jnp.bfloat16).astype(jnp.float32), bias)
    assert jnp.allclose(out, ref_bf16, atol=1e-4, rtol=1e-4), \
        "mismatch vs bf16-operand reference"

    # loose check vs the full-precision f32 reference (bf16 streaming contract)
    ref_f32 = _reference(x, weight, bias)
    assert jnp.allclose(out, ref_f32, atol=3e-2, rtol=3e-2), \
        "mismatch vs f32 reference"

    print("KERNEL_OK")
</pallas_src>

<mosaic_0001>
module attributes {stable_mosaic.version = 11 : i64} {
  func.func @_deconv_kernel(%arg0: i32, %arg1: i32, %arg2: memref<1x4x128xbf16, #tpu.memory_space<vmem>>, %arg3: memref<64x4xbf16, #tpu.memory_space<vmem>>, %arg4: memref<64x1xf32, #tpu.memory_space<vmem>>, %arg5: memref<1x64x128xf32, #tpu.memory_space<vmem>>) attributes {dimension_semantics = [#tpu.dimension_semantics<parallel>, #tpu.dimension_semantics<parallel>], iteration_bounds = array<i64: 2, 2>, scalar_prefetch = 0 : i64, scratch_operands = 0 : i64, tpu.core_type = #tpu.core_type<tc>, window_params = [{transform_indices = @transform_0, window_bounds = array<i64: 1, 4, 128>}, {pipeline_mode = #tpu.pipeline_mode<synchronous>, transform_indices = @transform_1, window_bounds = array<i64: 64, 4>}, {pipeline_mode = #tpu.pipeline_mode<synchronous>, transform_indices = @transform_2, window_bounds = array<i64: 64, 1>}, {transform_indices = @transform_3, window_bounds = array<i64: 1, 64, 128>}]} {
    %c0 = arith.constant 0 : index
    %c0_0 = arith.constant 0 : index
    %0 = vector.load %arg3[%c0, %c0_0] : memref<64x4xbf16, #tpu.memory_space<vmem>>, vector<64x4xbf16>
    %c0_1 = arith.constant 0 : index
    %c0_2 = arith.constant 0 : index
    %c0_3 = arith.constant 0 : index
    %1 = vector.load %arg2[%c0_1, %c0_2, %c0_3] : memref<1x4x128xbf16, #tpu.memory_space<vmem>>, vector<1x4x128xbf16>
    %2 = vector.shape_cast %1 : vector<1x4x128xbf16> to vector<4x128xbf16>
    %cst = arith.constant dense<0.000000e+00> : vector<64x128xf32>
    %3 = tpu.matmul %0, %2, %cst {dimension_numbers = #tpu.dot_dimension_numbers<[1], [0], [0], [1], [0, 0, 1, 1], [], []>} : vector<64x4xbf16>, vector<4x128xbf16>, vector<64x128xf32> -> vector<64x128xf32>
    %c0_4 = arith.constant 0 : index
    %c0_5 = arith.constant 0 : index
    %4 = vector.load %arg4[%c0_4, %c0_5] : memref<64x1xf32, #tpu.memory_space<vmem>>, vector<64x1xf32>
    %5 = vector.broadcast %4 : vector<64x1xf32> to vector<64x128xf32>
    %6 = arith.addf %3, %5 : vector<64x128xf32>
    %c0_6 = arith.constant 0 : index
    %c0_7 = arith.constant 0 : index
    %c0_8 = arith.constant 0 : index
    %7 = vector.load %arg5[%c0_6, %c0_7, %c0_8] : memref<1x64x128xf32, #tpu.memory_space<vmem>>, vector<1x64x128xf32>
    %8 = vector.shape_cast %7 : vector<1x64x128xf32> to vector<64x128xf32>
    %9 = vector.shape_cast %6 : vector<64x128xf32> to vector<1x64x128xf32>
    tpu.vector_store %arg5[%c0_6, %c0_7, %c0_8], %9 {strides = array<i32>} : memref<1x64x128xf32, #tpu.memory_space<vmem>>, vector<1x64x128xf32>,
    return
  }
  func.func @transform_0(%arg0: i32, %arg1: i32) -> (i32, i32, i32) {
    %c0_i32 = arith.constant 0 : i32
    %c0_i32_0 = arith.constant 0 : i32
    return %arg0, %c0_i32, %arg1 : i32, i32, i32
  }
  func.func @transform_1(%arg0: i32, %arg1: i32) -> (i32, i32) {
    %c0_i32 = arith.constant 0 : i32
    %c0_i32_0 = arith.constant 0 : i32
    %c0_i32_1 = arith.constant 0 : i32
    return %c0_i32, %c0_i32_0 : i32, i32
  }
  func.func @transform_2(%arg0: i32, %arg1: i32) -> (i32, i32) {
    %c0_i32 = arith.constant 0 : i32
    %c0_i32_0 = arith.constant 0 : i32
    %c0_i32_1 = arith.constant 0 : i32
    return %c0_i32, %c0_i32_0 : i32, i32
  }
  func.func @transform_3(%arg0: i32, %arg1: i32) -> (i32, i32, i32) {
    %c0_i32 = arith.constant 0 : i32
    %c0_i32_0 = arith.constant 0 : i32
    return %arg0, %c0_i32, %arg1 : i32, i32, i32
  }
}

</mosaic_0001>

<llo_original>
// kernel: tpu_custom_call.1
$region0: #{tpu_custom_call.1}
  #allocation0 [shape = 'u32[]', space=smem, size = 0x4, offset = 0x4, fixed_abs, tag = 'smem constant byte address 0x4 - core index']
  #allocation1 [shape = 'u32[144,128]{1,0:T(1,128)}', space=vmem, size = 0x12000, scoped, tag = 'internal scratch']
  %s0 = inlined_call_operand.vmem [shape: bf16[2,4,256], index: 0, kind: input, shape index: {}]
  %s1 = inlined_call_operand.vmem [shape: bf16[64,4], index: 1, kind: input, shape index: {}]
  %s2 = inlined_call_operand.vmem [shape: f32[64,1], index: 2, kind: input, shape index: {}]
  %s3 = inlined_call_operand.hbm [shape: f32[2,64,256], index: 3, kind: output, shape index: {}]
  %s4 = sld [smem:[#allocation0]]
  $region45: #{tpu_custom_call.1} parent=0
    _
  %s6 = ssub.s32 1, %s4
  %s7 = scalar_select 0, %s6, %s4
  $region1: #{tpu_custom_call.1} parent=0
    #allocation2 [shape = 'u8[65536]{0}', space=vmem, size = 0x10000, scoped, tag = 'output window, operand 0']
    #allocation3 [shape = 's32[2]{0}', space=sflag, size = 0x8, scoped, tag = 'scoped memory for tpu_custom_call.1']
    %8 = vsyncpa [#allocation3], 0
    %s9 = scalar_lea.sflag [#allocation3], 1
    %10 = vsyncpa %s9, 0
    loop: start=0, step=1, limit=6
    $region2: #{tpu_custom_call.1} parent=1 // loop_pre_header
      _
    $region3: #{tpu_custom_call.1} parent=1 // loop_header
      %s12 = sphi 0, %s16
      %p13 = scmp.ge.s32.totalorder %s12, 6
      %s19 = sphi 0, %s31
      %s20 = sphi 0, %s27
      %s21 = sphi 0, %s19
      %s22 = sphi 0, %s20
      %s23 = sphi 0, %s21
      %s24 = sphi 0, %s22
      %s36 = sphi 0, %s38
      %s39 = sphi 0, %s36
      %s40 = sphi 0, %s39
      %s56 = sphi 0, %s40
      %s60 = sphi 0, %s60
      %s62 = sphi 0, %s60
      %s63 = sphi 0, %s62
      %s77 = sphi 0, %s63
      %s81 = sphi 0, %s81
      %s83 = sphi 0, %s81
      %s84 = sphi 0, %s83
      %s98 = sphi 0, %s84
      %s106 = sphi 0, %s108
      %s109 = sphi 0, %s106
      %s110 = sphi 0, %s109
      %s126 = sphi 0, %s110
    $region4: #{tpu_custom_call.1} parent=1 // loop_header_branch
      %15 = sbr.rel (%p13) target = $region8
    $region5: #{tpu_custom_call.1} parent=1 // loop_body
      %s17 = ssub.s32 %s12, 1
      %s18 = ssub.s32 %s12, 2
      %s25 = sadd.s32 1, %s20
      %p26 = scmp.ge.s32.totalorder %s25, 2
      %s27 = scalar_select %p26, 0, %s25
      %s28 = sadd.s32 1, %s19
      %s29 = scalar_select %p26, %s28, %s19
      %p30 = scmp.ge.s32.totalorder %s29, 2
      %s31 = scalar_select %p30, 0, %s29
      %s32 = ssub.s32 %s19, %s31
      %s33 = ssub.s32 %s20, %s27
      %s34 = sor.u32 %s32, %s33
      %p35 = scmp.eq.s32.totalorder %s34, 0
      %s37 = sadd.s32 %s36, 1
      %s38 = scalar_select %p35, %s36, %s37
      %p41 = pneg %p35
      %p42 = scmp.eq.s32.totalorder %s12, 3
      %p43 = por %p41, %p42
      %p44 = scmp.ne.s32.totalorder %s36, %s39
      %p45 = scmp.eq.s32.totalorder %s12, 0
      %p46 = por %p44, %p45
      %p47 = scmp.ne.s32.totalorder %s36, %s39
      %p48 = scmp.eq.s32.totalorder %s17, 3
      %p49 = por %p47, %p48
      %p50 = scmp.ne.s32.totalorder %s39, %s40
      %p51 = scmp.eq.s32.totalorder %s17, 0
      %p52 = por %p50, %p51
      %p53 = scmp.ne.s32.totalorder %s39, %s40
      %p54 = scmp.eq.s32.totalorder %s18, 3
      %p55 = por %p53, %p54
      %p57 = scmp.ne.s32.totalorder %s40, %s56
      %p58 = scmp.eq.s32.totalorder %s18, 0
      %p59 = por %p57, %p58
      %s61 = sadd.s32 %s60, 1
      %p64 = scmp.eq.s32.totalorder %s12, 3
      %p65 = scmp.ne.s32.totalorder %s60, %s62
      %p66 = scmp.eq.s32.totalorder %s12, 0
      %p67 = por %p65, %p66
      %p68 = scmp.ne.s32.totalorder %s60, %s62
      %p69 = scmp.eq.s32.totalorder %s17, 3
      %p70 = por %p68, %p69
      %p71 = scmp.ne.s32.totalorder %s62, %s63
      %p72 = scmp.eq.s32.totalorder %s17, 0
      %p73 = por %p71, %p72
      %p74 = scmp.ne.s32.totalorder %s62, %s63
      %p75 = scmp.eq.s32.totalorder %s18, 3
      %p76 = por %p74, %p75
      %p78 = scmp.ne.s32.totalorder %s63, %s77
      %p79 = scmp.eq.s32.totalorder %s18, 0
      %p80 = por %p78, %p79
      %s82 = sadd.s32 %s81, 1
      %p85 = scmp.eq.s32.totalorder %s12, 3
      %p86 = scmp.ne.s32.totalorder %s81, %s83
      %p87 = scmp.eq.s32.totalorder %s12, 0
      %p88 = por %p86, %p87
      %p89 = scmp.ne.s32.totalorder %s81, %s83
      %p90 = scmp.eq.s32.totalorder %s17, 3
      %p91 = por %p89, %p90
      %p92 = scmp.ne.s32.totalorder %s83, %s84
      %p93 = scmp.eq.s32.totalorder %s17, 0
      %p94 = por %p92, %p93
      %p95 = scmp.ne.s32.totalorder %s83, %s84
      %p96 = scmp.eq.s32.totalorder %s18, 3
      %p97 = por %p95, %p96
      %p99 = scmp.ne.s32.totalorder %s84, %s98
      %p100 = scmp.eq.s32.totalorder %s18, 0
      %p101 = por %p99, %p100
      %s102 = ssub.s32 %s19, %s31
      %s103 = ssub.s32 %s20, %s27
      %s104 = sor.u32 %s102, %s103
      %p105 = scmp.eq.s32.totalorder %s104, 0
      %s107 = sadd.s32 %s106, 1
      %s108 = scalar_select %p105, %s106, %s107
      %p111 = pneg %p105
      %p112 = scmp.eq.s32.totalorder %s12, 3
      %p113 = por %p111, %p112
      %p114 = scmp.ne.s32.totalorder %s106, %s109
      %p115 = scmp.eq.s32.totalorder %s12, 0
      %p116 = por %p114, %p115
      %p117 = scmp.ne.s32.totalorder %s106, %s109
      %p118 = scmp.eq.s32.totalorder %s17, 3
      %p119 = por %p117, %p118
      %p120 = scmp.ne.s32.totalorder %s109, %s110
      %p121 = scmp.eq.s32.totalorder %s17, 0
      %p122 = por %p120, %p121
      %p123 = scmp.ne.s32.totalorder %s109, %s110
      %p124 = scmp.eq.s32.totalorder %s18, 3
      %p125 = por %p123, %p124
      %p127 = scmp.ne.s32.totalorder %s110, %s126
      %p128 = scmp.eq.s32.totalorder %s18, 0
      %p129 = por %p127, %p128
      %p130 = scmp.le.s32.totalorder 1, %s12
      %p131 = scmp.lt.s32.totalorder %s12, 5
      %p132 = pnand %p130, %p131
      %p133 = pneg %p132
      // Predicated region
      $region9: #{tpu_custom_call.1} parent=5 // pred_check
        _
      $region10: #{tpu_custom_call.1} parent=5 // pred_check_branch
        %135 = sbr.rel (%p132) target = $region12
      $region11: #{tpu_custom_call.1} parent=5 // pred_region
        %s136 = ssub.s32 %s12, 1
        // Predicated region
        $region13: #{tpu_custom_call.1} parent=11 // pred_check
          %p137 = pneg %p73
        $region14: #{tpu_custom_call.1} parent=11 // pred_check_branch
          %139 = sbr.rel (%p137) target = $region16
        $region15: #{tpu_custom_call.1} parent=11 // pred_region
          _
        $region16: #{tpu_custom_call.1} parent=11 // pred_fallthru
          _
        // Predicated region
        $region17: #{tpu_custom_call.1} parent=11 // pred_check
          %p140 = pneg %p94
        $region18: #{tpu_custom_call.1} parent=11 // pred_check_branch
          %142 = sbr.rel (%p140) target = $region20
        $region19: #{tpu_custom_call.1} parent=11 // pred_region
          _
        $region20: #{tpu_custom_call.1} parent=11 // pred_fallthru
          _
      $region12: #{tpu_custom_call.1} parent=5 // pred_fallthru
        _
      %p143 = scmp.lt.s32.totalorder %s12, 4
      // Predicated region
      $region21: #{tpu_custom_call.1} parent=5 // pred_check
        %p144 = pneg %p143
      $region22: #{tpu_custom_call.1} parent=5 // pred_check_branch
        %146 = sbr.rel (%p144) target = $region24
      $region23: #{tpu_custom_call.1} parent=5 // pred_region
        // Predicated region
        $region25: #{tpu_custom_call.1} parent=23 // pred_check
          %p147 = pneg %p46
        $region26: #{tpu_custom_call.1} parent=23 // pred_check_branch
          %149 = sbr.rel (%p147) target = $region28
        $region27: #{tpu_custom_call.1} parent=23 // pred_region
          %p150 = scmp.lt.s32.totalorder %s19, 1
          %s151 = scalar_select %p150, %s19, 1
          %p152 = scmp.lt.s32.totalorder %s20, 1
          %s153 = scalar_select %p152, %s20, 1
          %s154 = smul.addr %s151, 2
          %s155 = sadd.s32 %s153, %s154
          %s156 = smul.addr %s155, 2
          %s157 = scalar_lea.vmem %s0, %s156
        $region28: #{tpu_custom_call.1} parent=23 // pred_fallthru
          _
      $region24: #{tpu_custom_call.1} parent=5 // pred_fallthru
        _
      %p158 = scmp.le.s32.totalorder 1, %s12
      %p159 = scmp.lt.s32.totalorder %s12, 5
      %p160 = pnand %p158, %p159
      %p161 = pneg %p160
      // Predicated region
      $region29: #{tpu_custom_call.1} parent=5 // pred_check
        _
      $region30: #{tpu_custom_call.1} parent=5 // pred_check_branch
        %163 = sbr.rel (%p160) target = $region32
      $region31: #{tpu_custom_call.1} parent=5 // pred_region
        %s164 = ssub.s32 %s12, 1
        %p165 = scmp.lt.s32.totalorder %s21, 1
        %s166 = scalar_select %p165, %s21, 1
        %p167 = scmp.lt.s32.totalorder %s22, 1
        %s168 = scalar_select %p167, %s22, 1
        %s169 = smul.addr %s166, 2
        %s170 = sadd.s32 %s168, %s169
        %s171 = smul.addr %s170, 2
        %s172 = scalar_lea.vmem %s0, %s171
        %p173 = pneg %p52
        %p174 = pneg %p49
        %p175 = pneg %p73
        %p176 = pneg %p70
        %p177 = pneg %p94
        %p178 = pneg %p91
        %p179 = pneg %p122
        %p180 = pneg %p119
        %s181 = sand.u32 %s109, 1
        %s182 = scalar_lea.sflag [#allocation3], %s181
        %s183 = sand.u32 %s109, 1
        %s184 = smul.addr %s183, 64
        %s185 = scalar_lea.vmem [#allocation2], %s184
        %p186 = scmp.lt.s32.totalorder %s21, 1
        %s187 = scalar_select %p186, %s21, 1
        %p188 = scmp.lt.s32.totalorder %s22, 1
        %s189 = scalar_select %p188, %s22, 1
        %s190 = smul.addr %s187, 2
        %s191 = sadd.s32 %s189, %s190
        %s192 = smul.addr %s191, 2
        %s193 = scalar_lea.vmem %s0, %s192
        %v195 = vld [vmem:[%s1] sm:$0xf]
        %v196 = vld [vmem:[%s1 + $0x4] sm:$0xf]
        %v197 = vld [vmem:[%s1 + $0x8] sm:$0xf]
        %v198 = vld [vmem:[%s1 + $0xc] sm:$0xf]
        %v199 = vld [vmem:[%s1 + $0x10] sm:$0xf]
        %v200 = vld [vmem:[%s1 + $0x14] sm:$0xf]
        %v201 = vld [vmem:[%s1 + $0x18] sm:$0xf]
        %v202 = vld [vmem:[%s1 + $0x1c] sm:$0xf]
        %v203 = vld [vmem:[%s193] sm:$0x3]
        %v204 = vld [vmem:[%s2] sm:$0xff]
        %v205 = vld [vmem:[%s2 + $0x8] sm:$0xff]
        %v206 = vld [vmem:[%s2 + $0x10] sm:$0xff]
        %v207 = vld [vmem:[%s2 + $0x18] sm:$0xff]
        %v208 = vld [vmem:[%s2 + $0x20] sm:$0xff]
        %v209 = vld [vmem:[%s2 + $0x28] sm:$0xff]
        %v210 = vld [vmem:[%s2 + $0x30] sm:$0xff]
        %v211 = vld [vmem:[%s2 + $0x38] sm:$0xff]
        %213 = vset.pattern.permute.xlu0 0
        %214 = vperm.xlu0 %213, %v204
        %v215 = vpop.permute.xlu0 %214
        %218 = vset.pattern.permute.xlu0 0
        %219 = vperm.xlu0 %218, %v205
        %v220 = vpop.permute.xlu0 %219
        %223 = vset.pattern.permute.xlu0 0
        %224 = vperm.xlu0 %223, %v206
        %v225 = vpop.permute.xlu0 %224
        %228 = vset.pattern.permute.xlu0 0
        %229 = vperm.xlu0 %228, %v207
        %v230 = vpop.permute.xlu0 %229
        %233 = vset.pattern.permute.xlu0 0
        %234 = vperm.xlu0 %233, %v208
        %v235 = vpop.permute.xlu0 %234
        %238 = vset.pattern.permute.xlu0 0
        %239 = vperm.xlu0 %238, %v209
        %v240 = vpop.permute.xlu0 %239
        %243 = vset.pattern.permute.xlu0 0
        %244 = vperm.xlu0 %243, %v210
        %v245 = vpop.permute.xlu0 %244
        %248 = vset.pattern.permute.xlu0 0
        %249 = vperm.xlu0 %248, %v211
        %v250 = vpop.permute.xlu0 %249
        %v260 = vunpack.c.l.b16 %v195
        %v261 = vunpack.c.l.b16 %v196
        %v262 = vunpack.c.l.b16 %v197
        %v263 = vunpack.c.l.b16 %v198
        %v264 = vunpack.c.l.b16 %v199
        %v265 = vunpack.c.l.b16 %v200
        %v266 = vunpack.c.l.b16 %v201
        %v267 = vunpack.c.l.b16 %v202
        %v268 = vpack.c.b16 %v261, %v260
        %v269 = vpack.c.b16 %v263, %v262
        %v270 = vpack.c.b16 %v265, %v264
        %v271 = vpack.c.b16 %v267, %v266
        %vm272 = vcmask 31744
        %v274 = vsel %vm272, %v268, 0
        %v277 = vsel %vm272, %v269, 0
        %v280 = vsel %vm272, %v270, 0
        %v283 = vsel %vm272, %v271, 0
        %vm285 = vcmask 1041408
        %v287 = vsel %vm285, %v203, 0
        %289 = vmatprep.subr.bf16.mxu0 0
        %290 = vmatpush1.bf16.msra.mxu0 0
        %291 = vmatprep.subr.bf16.mxu0 0
        %292 = vmatpush1.bf16.msra.mxu0 0
        %293 = vmatprep.subr.bf16.mxu0 0
        %294 = vmatpush1.bf16.msra.mxu0 0
        %295 = vmatprep.subr.bf16.mxu0 0
        %296 = vmatpush1.bf16.msra.mxu0 0
        %297 = vmatprep.subr.bf16.mxu0 0
        %298 = vmatpush1.bf16.msra.mxu0 0
        %299 = vmatprep.subr.bf16.mxu0 0
        %300 = vmatpush1.bf16.msra.mxu0 0
        %301 = vmatprep.subr.bf16.mxu0 0
        %302 = vmatpush1.bf16.msra.mxu0 0
        %303 = vmatprep.subr.bf16.mxu0 0
        %304 = vmatpush1.bf16.msra.mxu0 %v287
        %305 = vmatprep.subr.bf16.mxu0 0
        %306 = vmatpush2.bf16.msra.mxu0 0
        %307 = vmatprep.subr.bf16.mxu0 0
        %308 = vmatpush2.bf16.msra.mxu0 0
        %309 = vmatprep.subr.bf16.mxu0 0
        %310 = vmatpush2.bf16.msra.mxu0 0
        %311 = vmatprep.subr.bf16.mxu0 0
        %312 = vmatpush2.bf16.msra.mxu0 0
        %313 = vmatprep.subr.bf16.mxu0 0
        %314 = vmatpush2.bf16.msra.mxu0 0
        %315 = vmatprep.subr.bf16.mxu0 0
        %316 = vmatpush2.bf16.msra.mxu0 0
        %317 = vmatprep.subr.bf16.mxu0 0
        %318 = vmatpush2.bf16.msra.mxu0 0
        %319 = vmatprep.subr.bf16.mxu0 0
        %320 = vmatpush2.bf16.msra.mxu0 0
        %321 = vmatprep.mubr.bf16.mxu0 0
        %322 = vmatmul.mubr.bf16.gmra.mxu0 %v274
        %v323 = vpop.f32.mrf.mxu0
        %v324 = vadd.f32 %v215, %v323
        %v325 = vpop.f32.mrf.mxu0
        %v326 = vpop.f32.mrf.mxu0
        %v327 = vadd.f32 %v220, %v326
        %v328 = vpop.f32.mrf.mxu0
        %329 = vmatprep.mubr.bf16.mxu0 0
        %330 = vmatmul.mubr.bf16.gmra.mxu0 %v277
        %v331 = vpop.f32.mrf.mxu0
        %v332 = vadd.f32 %v225, %v331
        %v333 = vpop.f32.mrf.mxu0
        %v334 = vpop.f32.mrf.mxu0
        %v335 = vadd.f32 %v230, %v334
        %v336 = vpop.f32.mrf.mxu0
        %337 = vmatprep.mubr.bf16.mxu0 0
        %338 = vmatmul.mubr.bf16.gmra.mxu0 %v280
        %v339 = vpop.f32.mrf.mxu0
        %v340 = vadd.f32 %v235, %v339
        %v341 = vpop.f32.mrf.mxu0
        %v342 = vpop.f32.mrf.mxu0
        %v343 = vadd.f32 %v240, %v342
        %v344 = vpop.f32.mrf.mxu0
        %345 = vmatprep.mubr.bf16.mxu0 0
        %346 = vmatmul.mubr.bf16.gmra.mxu0 %v283
        %v347 = vpop.f32.mrf.mxu0
        %v348 = vadd.f32 %v245, %v347
        %v349 = vpop.f32.mrf.mxu0
        %v350 = vpop.f32.mrf.mxu0
        %v351 = vadd.f32 %v250, %v350
        %v352 = vpop.f32.mrf.mxu0
        %353 = vdwg.mxu0
        %354 = vst [vmem:[%s185] sm:$0xff] %v324
        %355 = vst [vmem:[%s185 + $0x8] sm:$0xff] %v327
        %356 = vst [vmem:[%s185 + $0x10] sm:$0xff] %v332
        %357 = vst [vmem:[%s185 + $0x18] sm:$0xff] %v335
        %358 = vst [vmem:[%s185 + $0x20] sm:$0xff] %v340
        %359 = vst [vmem:[%s185 + $0x28] sm:$0xff] %v343
        %360 = vst [vmem:[%s185 + $0x30] sm:$0xff] %v348
        %361 = vst [vmem:[%s185 + $0x38] sm:$0xff] %v351
        %s362 = sand.u32 %s109, 1
        %s363 = scalar_lea.sflag [#allocation3], %s362
        %s364 = sand.u32 %s109, 1
        %s365 = smul.addr %s364, 64
        %s366 = scalar_lea.vmem [#allocation2], %s365
        // Predicated region
        $region33: #{tpu_custom_call.1} parent=31 // pred_check
          %p367 = pneg %p119
        $region34: #{tpu_custom_call.1} parent=31 // pred_check_branch
          %369 = sbr.rel (%p367) target = $region36
        $region35: #{tpu_custom_call.1} parent=31 // pred_region
          %s371 = ssub.s32 1024, 1024
          %372 = vsyncadd %s363, %s371
          %s373 = smul.addr %s21, 16
          %s374 = sadd.s32 %s22, %s373
          %s375 = smul.addr %s374, 128
          %s376 = scalar_lea.hbm %s3, %s375
          %s377 = sshll.u32 %s366, 4
          %s378 = int_to_ptr.vmem [resolvable:$true] %s377
          %383 = dma.vmem_to_hbm [thread:$0]  %s378, 1024, %s376, %s363, 128, 256, 8
        $region36: #{tpu_custom_call.1} parent=31 // pred_fallthru
          _
      $region32: #{tpu_custom_call.1} parent=5 // pred_fallthru
        _
      %p384 = scmp.le.s32.totalorder 2, %s12
      // Predicated region
      $region37: #{tpu_custom_call.1} parent=5 // pred_check
        %p385 = pneg %p384
      $region38: #{tpu_custom_call.1} parent=5 // pred_check_branch
        %387 = sbr.rel (%p385) target = $region40
      $region39: #{tpu_custom_call.1} parent=5 // pred_region
        %s388 = ssub.s32 %s12, 2
        // Predicated region
        $region41: #{tpu_custom_call.1} parent=39 // pred_check
          %p389 = pneg %p125
        $region42: #{tpu_custom_call.1} parent=39 // pred_check_branch
          %391 = sbr.rel (%p389) target = $region44
        $region43: #{tpu_custom_call.1} parent=39 // pred_region
          %s392 = sand.u32 %s110, 1
          %s393 = scalar_lea.sflag [#allocation3], %s392
          %s394 = sand.u32 %s110, 1
          %s395 = smul.addr %s394, 64
          %s396 = scalar_lea.vmem [#allocation2], %s395
          %397 = dma.done %s393, 1024
        $region44: #{tpu_custom_call.1} parent=39 // pred_fallthru
          _
      $region40: #{tpu_custom_call.1} parent=5 // pred_fallthru
        _
    $region6: #{tpu_custom_call.1} parent=1 // loop_footer
      %s16 = sadd.s32 1, %s12
    $region7: #{tpu_custom_call.1} parent=1 // loop_footer_branch
      %11 = sbr.rel target = $region3
    $region8: #{tpu_custom_call.1} parent=1 // loop_exit
      _
    %398 = vsyncpa [#allocation3], 1
    %s399 = scalar_lea.sflag [#allocation3], 1
    %400 = vsyncpa %s399, 1

</llo_original>
